<compile_context>
chip_gen: v5e
topology: v5e:2x2
jax: 0.10.0
libtpu: 0.0.40
codegen_flags: <defaults>
</compile_context>

<pallas_src>
import functools

import jax
import jax.numpy as jnp
from jax.experimental import pallas as pl
from jax.experimental.pallas import tpu as pltpu


_NUM_CORES = 2  # batch shards across the 2 TCs on v7x; harmless on 1-TC chips


def _focal_partial_kernel(logits_ref, target_ref, out_ref, acc_ref, *,
                          n_total, tile_n, tiles_per_core):
    ci = pl.program_id(0)          # core-parallel axis
    j = pl.program_id(1)           # streaming reduction axis

    @pl.when(j == 0)
    def _init():
        acc_ref[...] = jnp.zeros_like(acc_ref)

    x = logits_ref[...]            # (tile_n, C)
    if x.dtype != jnp.float32:
        x = x.astype(jnp.float32)
    t = target_ref[...]            # (tile_n, 1) int32
    tn, c = x.shape

    # Numerically stable log-sum-exp along the class (lane) axis.
    m = jnp.max(x, axis=-1, keepdims=True)                               # (tn,1)
    lse = m + jnp.log(jnp.sum(jnp.exp(x - m), axis=-1, keepdims=True))   # (tn,1)

    # Target logit gathered directly from x (no shifted copy kept live):
    #   nll = lse - x[target]
    cls_ids = jax.lax.broadcasted_iota(jnp.int32, (tn, c), 1)
    tgt_x = jnp.sum(jnp.where(cls_ids == t, x, 0.0), axis=-1, keepdims=True)
    nll = lse - tgt_x                                                    # (tn,1)

    # Global tile index; only tiles running past the true batch need masking.
    g = ci * tiles_per_core + j
    has_padding = (g + 1) * tile_n > n_total

    @pl.when(has_padding)
    def _masked_sum():
        row_ids = jax.lax.broadcasted_iota(jnp.int32, (tn, 1), 0) + g * tile_n
        valid = jnp.where(row_ids < n_total, nll, 0.0)
        acc_ref[...] += jnp.sum(valid, axis=0, keepdims=True)

    @pl.when(jnp.logical_not(has_padding))
    def _full_sum():
        acc_ref[...] += jnp.sum(nll, axis=0, keepdims=True)

    @pl.when(j == pl.num_programs(1) - 1)
    def _finalize():
        # Lane-dense (1, 8, 128) write; wrapper reads element [ci, 0, 0].
        out_ref[...] = jnp.broadcast_to(acc_ref[...], out_ref.shape)


def focal_loss(logits, targets, gamma=2.0, eps=1e-7):
    # eps is unused in the reference forward pass; kept for signature parity.
    del eps
    n, c = logits.shape
    itemsize = jnp.dtype(logits.dtype).itemsize

    # Tile sizing from the f32 working set, not just the HBM itemsize:
    #   2 x (C * itemsize)  double-buffered input DMA
    # + 3 x (C * 4)         f32 cast / exp / select temporaries
    per_row_bytes = 2 * c * itemsize + 3 * c * 4
    vmem_budget = 40 * 1024 * 1024       # headroom under v7x's 64 MiB / TC
    tile_bytes_cap = 8 * 1024 * 1024     # ~8 MiB of logits per pipeline buffer
    tile_n = min(vmem_budget // per_row_bytes,
                 tile_bytes_cap // max(1, c * itemsize))
    # Never need more rows per tile than one core's share of the batch.
    per_core_rows = -(-n // _NUM_CORES)
    per_core_rows = ((per_core_rows + 7) // 8) * 8
    tile_n = min(tile_n, per_core_rows)
    tile_n = max(8, (tile_n // 8) * 8)
    # TODO(synk): add a class-axis (online logsumexp) tiling path for very
    # large C, where even 8 rows x C exceeds the VMEM budget.

    tiles_per_core = -(-n // (_NUM_CORES * tile_n))
    n_pad = _NUM_CORES * tiles_per_core * tile_n

    t2 = targets.astype(jnp.int32).reshape(n, 1)
    if n_pad != n:
        logits = jnp.pad(logits, ((0, n_pad - n), (0, 0)))
        t2 = jnp.pad(t2, ((0, n_pad - n), (0, 0)))

    grid = (_NUM_CORES, tiles_per_core)
    partial = pl.pallas_call(
        functools.partial(_focal_partial_kernel, n_total=n, tile_n=tile_n,
                          tiles_per_core=tiles_per_core),
        out_shape=jax.ShapeDtypeStruct((_NUM_CORES, 8, 128), jnp.float32),
        grid=grid,
        in_specs=[
            pl.BlockSpec((tile_n, c), lambda ci, j: (ci * tiles_per_core + j, 0)),
            pl.BlockSpec((tile_n, 1), lambda ci, j: (ci * tiles_per_core + j, 0)),
        ],
        out_specs=pl.BlockSpec((1, 8, 128), lambda ci, j: (ci, 0, 0)),
        scratch_shapes=[pltpu.VMEM((1, 1), jnp.float32)],
        compiler_params=pltpu.CompilerParams(
            dimension_semantics=("parallel", "arbitrary"),
            vmem_limit_bytes=48 * 1024 * 1024,
        ),
    )(logits, t2)

    # Mean + focal transform on the already-reduced scalar CE (scalar math in
    # the wrapper; matches the reference exactly).
    ce = jnp.sum(partial[:, 0, 0]) / jnp.float32(n)
    p = jnp.exp(-ce)
    one_m = 1.0 - p
    mod = one_m * one_m if gamma == 2.0 else one_m ** gamma
    return mod * ce


def _focal_loss_ref(logits, targets, gamma=2.0):
    # Pure-JAX reference mirroring torch.nn.CrossEntropyLoss + focal transform.
    x = logits.astype(jnp.float32)
    logp_all = jax.nn.log_softmax(x, axis=-1)
    nll = -jnp.take_along_axis(
        logp_all, targets[:, None].astype(jnp.int32), axis=-1)[:, 0]
    ce = jnp.mean(nll)
    p = jnp.exp(-ce)
    return (1.0 - p) ** gamma * ce


if __name__ == "__main__":
    key = jax.random.PRNGKey(0)
    k_logits, k_tgt = jax.random.split(key)

    n, c = 8, 32  # batch=8, num_classes=32
    logits = jax.random.normal(k_logits, (n, c), dtype=jnp.float32)
    targets = jax.random.randint(k_tgt, (n,), 0, c, dtype=jnp.int32)

    loss = jax.block_until_ready(focal_loss(logits, targets, gamma=2.0))
    ref = _focal_loss_ref(logits, targets, gamma=2.0)
    assert jnp.allclose(loss, ref, rtol=1e-5, atol=1e-6), (loss, ref)

    # Non-multiple-of-tile batch exercises the padded-row masking path.
    n2 = 13
    logits2 = jax.random.normal(k_logits, (n2, c), dtype=jnp.float32)
    targets2 = jax.random.randint(k_tgt, (n2,), 0, c, dtype=jnp.int32)
    loss2 = jax.block_until_ready(focal_loss(logits2, targets2, gamma=2.0))
    ref2 = _focal_loss_ref(logits2, targets2, gamma=2.0)
    assert jnp.allclose(loss2, ref2, rtol=1e-5, atol=1e-6), (loss2, ref2)

    print("KERNEL_OK")
</pallas_src>

<mosaic_0001>
module attributes {stable_mosaic.version = 11 : i64} {
  func.func @_focal_partial_kernel(%arg0: i32, %arg1: i32, %arg2: memref<8x32xf32, #tpu.memory_space<vmem>>, %arg3: memref<8x1xi32, #tpu.memory_space<vmem>>, %arg4: memref<1x8x128xf32, #tpu.memory_space<vmem>>, %arg5: memref<1x1xf32, #tpu.memory_space<vmem>>) attributes {dimension_semantics = [#tpu.dimension_semantics<parallel>, #tpu.dimension_semantics<arbitrary>], iteration_bounds = array<i64: 2, 1>, scalar_prefetch = 0 : i64, scratch_operands = 1 : i64, tpu.core_type = #tpu.core_type<tc>, window_params = [{transform_indices = @transform_0, window_bounds = array<i64: 8, 32>}, {transform_indices = @transform_1, window_bounds = array<i64: 8, 1>}, {transform_indices = @transform_2, window_bounds = array<i64: 1, 8, 128>}]} {
    %c0_i32 = arith.constant 0 : i32
    %0 = arith.cmpi eq, %arg1, %c0_i32 : i32
    %1 = arith.extui %0 : i1 to i32
    %c0_i32_0 = arith.constant 0 : i32
    %2 = arith.cmpi ne, %1, %c0_i32_0 : i32
    scf.if %2 {
      %cst_13 = arith.constant 0.000000e+00 : f32
      %35 = vector.broadcast %cst_13 : f32 to vector<1x1xf32>
      %c0_14 = arith.constant 0 : index
      %c0_15 = arith.constant 0 : index
      %36 = vector.load %arg5[%c0_14, %c0_15] : memref<1x1xf32, #tpu.memory_space<vmem>>, vector<1x1xf32>
      tpu.vector_store %arg5[%c0_14, %c0_15], %35 {strides = array<i32>} : memref<1x1xf32, #tpu.memory_space<vmem>>, vector<1x1xf32>,
    } else {
    }
    %c0 = arith.constant 0 : index
    %c0_1 = arith.constant 0 : index
    %3 = vector.load %arg2[%c0, %c0_1] : memref<8x32xf32, #tpu.memory_space<vmem>>, vector<8x32xf32>
    %c0_2 = arith.constant 0 : index
    %c0_3 = arith.constant 0 : index
    %4 = vector.load %arg3[%c0_2, %c0_3] : memref<8x1xi32, #tpu.memory_space<vmem>>, vector<8x1xi32>
    %cst = arith.constant dense<0xFF800000> : vector<8xf32>
    %5 = vector.multi_reduction <maximumf>, %3, %cst [1] : vector<8x32xf32> to vector<8xf32>
    %6 = vector.shape_cast %5 : vector<8xf32> to vector<8x1xf32>
    %7 = vector.broadcast %6 : vector<8x1xf32> to vector<8x32xf32>
    %8 = arith.subf %3, %7 : vector<8x32xf32>
    %9 = math.exp %8 : vector<8x32xf32>
    %cst_4 = arith.constant dense<0.000000e+00> : vector<8xf32>
    %10 = vector.multi_reduction <add>, %9, %cst_4 [1] : vector<8x32xf32> to vector<8xf32>
    %11 = vector.shape_cast %10 : vector<8xf32> to vector<8x1xf32>
    %12 = math.log %11 : vector<8x1xf32>
    %13 = arith.addf %6, %12 : vector<8x1xf32>
    %14 = tpu.iota {dimensions = array<i32: 1>} : vector<8x32xi32>
    %15 = vector.broadcast %4 : vector<8x1xi32> to vector<8x32xi32>
    %16 = arith.cmpi eq, %14, %15 : vector<8x32xi32>
    %cst_5 = arith.constant 0.000000e+00 : f32
    %17 = vector.broadcast %cst_5 : f32 to vector<8x32xf32>
    %18 = arith.select %16, %3, %17 : vector<8x32xi1>, vector<8x32xf32>
    %cst_6 = arith.constant dense<0.000000e+00> : vector<8xf32>
    %19 = vector.multi_reduction <add>, %18, %cst_6 [1] : vector<8x32xf32> to vector<8xf32>
    %20 = vector.shape_cast %19 : vector<8xf32> to vector<8x1xf32>
    %21 = arith.subf %13, %20 : vector<8x1xf32>
    %c1_i32 = arith.constant 1 : i32
    %22 = arith.muli %arg0, %c1_i32 : i32
    %23 = arith.addi %22, %arg1 : i32
    %c1_i32_7 = arith.constant 1 : i32
    %24 = arith.addi %23, %c1_i32_7 : i32
    %c8_i32 = arith.constant 8 : i32
    %25 = arith.muli %24, %c8_i32 : i32
    %c8_i32_8 = arith.constant 8 : i32
    %26 = arith.cmpi sgt, %25, %c8_i32_8 : i32
    %27 = arith.extui %26 : i1 to i32
    %c0_i32_9 = arith.constant 0 : i32
    %28 = arith.cmpi ne, %27, %c0_i32_9 : i32
    scf.if %28 {
      %35 = tpu.iota {dimensions = array<i32: 0>} : vector<8x1xi32>
      %c8_i32_13 = arith.constant 8 : i32
      %36 = arith.muli %23, %c8_i32_13 : i32
      %37 = vector.broadcast %36 : i32 to vector<8x1xi32>
      %38 = arith.addi %35, %37 : vector<8x1xi32>
      %c8_i32_14 = arith.constant 8 : i32
      %39 = vector.broadcast %c8_i32_14 : i32 to vector<8x1xi32>
      %40 = arith.cmpi slt, %38, %39 : vector<8x1xi32>
      %cst_15 = arith.constant 0.000000e+00 : f32
      %41 = vector.broadcast %cst_15 : f32 to vector<8x1xf32>
      %42 = arith.select %40, %21, %41 : vector<8x1xi1>, vector<8x1xf32>
      %c0_16 = arith.constant 0 : index
      %c0_17 = arith.constant 0 : index
      %43 = vector.load %arg5[%c0_16, %c0_17] : memref<1x1xf32, #tpu.memory_space<vmem>>, vector<1x1xf32>
      %cst_18 = arith.constant dense<0.000000e+00> : vector<1xf32>
      %44 = vector.multi_reduction <add>, %42, %cst_18 [0] : vector<8x1xf32> to vector<1xf32>
      %45 = vector.shape_cast %44 : vector<1xf32> to vector<1x1xf32>
      %46 = arith.addf %43, %45 : vector<1x1xf32>
      %c0_19 = arith.constant 0 : index
      %c0_20 = arith.constant 0 : index
      %47 = vector.load %arg5[%c0_19, %c0_20] : memref<1x1xf32, #tpu.memory_space<vmem>>, vector<1x1xf32>
      tpu.vector_store %arg5[%c0_19, %c0_20], %46 {strides = array<i32>} : memref<1x1xf32, #tpu.memory_space<vmem>>, vector<1x1xf32>,
    } else {
    }
    %true = arith.constant true
    %29 = arith.xori %26, %true : i1
    %30 = arith.extui %29 : i1 to i32
    %c0_i32_10 = arith.constant 0 : i32
    %31 = arith.cmpi ne, %30, %c0_i32_10 : i32
    scf.if %31 {
      %c0_13 = arith.constant 0 : index
      %c0_14 = arith.constant 0 : index
      %35 = vector.load %arg5[%c0_13, %c0_14] : memref<1x1xf32, #tpu.memory_space<vmem>>, vector<1x1xf32>
      %cst_15 = arith.constant dense<0.000000e+00> : vector<1xf32>
      %36 = vector.multi_reduction <add>, %21, %cst_15 [0] : vector<8x1xf32> to vector<1xf32>
      %37 = vector.shape_cast %36 : vector<1xf32> to vector<1x1xf32>
      %38 = arith.addf %35, %37 : vector<1x1xf32>
      %c0_16 = arith.constant 0 : index
      %c0_17 = arith.constant 0 : index
      %39 = vector.load %arg5[%c0_16, %c0_17] : memref<1x1xf32, #tpu.memory_space<vmem>>, vector<1x1xf32>
      tpu.vector_store %arg5[%c0_16, %c0_17], %38 {strides = array<i32>} : memref<1x1xf32, #tpu.memory_space<vmem>>, vector<1x1xf32>,
    } else {
    }
    %c0_i32_11 = arith.constant 0 : i32
    %32 = arith.cmpi eq, %arg1, %c0_i32_11 : i32
    %33 = arith.extui %32 : i1 to i32
    %c0_i32_12 = arith.constant 0 : i32
    %34 = arith.cmpi ne, %33, %c0_i32_12 : i32
    scf.if %34 {
      %c0_13 = arith.constant 0 : index
      %c0_14 = arith.constant 0 : index
      %35 = vector.load %arg5[%c0_13, %c0_14] : memref<1x1xf32, #tpu.memory_space<vmem>>, vector<1x1xf32>
      %36 = vector.shape_cast %35 : vector<1x1xf32> to vector<1x1x1xf32>
      %37 = vector.broadcast %36 : vector<1x1x1xf32> to vector<1x8x128xf32>
      %c0_15 = arith.constant 0 : index
      %c0_16 = arith.constant 0 : index
      %c0_17 = arith.constant 0 : index
      %38 = vector.load %arg4[%c0_15, %c0_16, %c0_17] : memref<1x8x128xf32, #tpu.memory_space<vmem>>, vector<1x8x128xf32>
      tpu.vector_store %arg4[%c0_15, %c0_16, %c0_17], %37 {strides = array<i32>} : memref<1x8x128xf32, #tpu.memory_space<vmem>>, vector<1x8x128xf32>,
    } else {
    }
    return
  }
  func.func @transform_0(%arg0: i32, %arg1: i32) -> (i32, i32) {
    %c1_i32 = arith.constant 1 : i32
    %0 = arith.muli %arg0, %c1_i32 : i32
    %1 = arith.addi %0, %arg1 : i32
    %c0_i32 = arith.constant 0 : i32
    %c0_i32_0 = arith.constant 0 : i32
    return %1, %c0_i32 : i32, i32
  }
  func.func @transform_1(%arg0: i32, %arg1: i32) -> (i32, i32) {
    %c1_i32 = arith.constant 1 : i32
    %0 = arith.muli %arg0, %c1_i32 : i32
    %1 = arith.addi %0, %arg1 : i32
    %c0_i32 = arith.constant 0 : i32
    %c0_i32_0 = arith.constant 0 : i32
    return %1, %c0_i32 : i32, i32
  }
  func.func @transform_2(%arg0: i32, %arg1: i32) -> (i32, i32, i32) {
    %c0_i32 = arith.constant 0 : i32
    %c0_i32_0 = arith.constant 0 : i32
    %c0_i32_1 = arith.constant 0 : i32
    return %arg0, %c0_i32, %c0_i32_0 : i32, i32, i32
  }
}

</mosaic_0001>

<llo_original>
// kernel: tpu_custom_call.1
$region0: #{tpu_custom_call.1}
  #allocation0 [shape = 'u32[]', space=smem, size = 0x4, offset = 0x4, fixed_abs, tag = 'smem constant byte address 0x4 - core index']
  #allocation1 [shape = 'u32[72,128]{1,0:T(1,128)}', space=vmem, size = 0x9000, scoped, tag = 'internal scratch']
  #allocation2 [shape = 'f32[1,1]{1,0:T(1,128)}', space=vmem, size = 0x200, scoped, tag = 'scratch operand']
  %s0 = inlined_call_operand.vmem [shape: f32[16,32], index: 0, kind: input, shape index: {}]
  %s1 = inlined_call_operand.vmem [shape: s32[16,1], index: 1, kind: input, shape index: {}]
  %s2 = inlined_call_operand.hbm [shape: f32[2,8,128], index: 2, kind: output, shape index: {}]
  %s3 = sld [smem:[#allocation0]]
  $region57: #{tpu_custom_call.1} parent=0
    _
  %s5 = ssub.s32 1, %s3
  %s6 = scalar_select 0, %s5, %s3
  $region1: #{tpu_custom_call.1} parent=0
    #allocation3 [shape = 'u8[8192]{0}', space=vmem, size = 0x2000, scoped, tag = 'output window, operand 0']
    #allocation4 [shape = 's32[2]{0}', space=sflag, size = 0x8, scoped, tag = 'scoped memory for tpu_custom_call.1']
    %7 = vsyncpa [#allocation4], 0
    %s8 = scalar_lea.sflag [#allocation4], 1
    %9 = vsyncpa %s8, 0
    loop: start=0, step=1, limit=4
    $region2: #{tpu_custom_call.1} parent=1 // loop_pre_header
      _
    $region3: #{tpu_custom_call.1} parent=1 // loop_header
      %s11 = sphi 0, %s15
      %p12 = scmp.ge.s32.totalorder %s11, 4
      %s18 = sphi 0, %s30
      %s19 = sphi 0, %s26
      %s20 = sphi 0, %s18
      %s21 = sphi 0, %s19
      %s22 = sphi 0, %s20
      %s23 = sphi 0, %s21
      %s35 = sphi 0, %s37
      %s38 = sphi 0, %s35
      %s39 = sphi 0, %s38
      %s55 = sphi 0, %s39
      %s63 = sphi 0, %s65
      %s66 = sphi 0, %s63
      %s67 = sphi 0, %s66
      %s83 = sphi 0, %s67
      %s89 = sphi 0, %s91
      %s92 = sphi 0, %s89
      %s93 = sphi 0, %s92
      %s109 = sphi 0, %s93
    $region4: #{tpu_custom_call.1} parent=1 // loop_header_branch
      %14 = sbr.rel (%p12) target = $region8
    $region5: #{tpu_custom_call.1} parent=1 // loop_body
      %s16 = ssub.s32 %s11, 1
      %s17 = ssub.s32 %s11, 2
      %s24 = sadd.s32 1, %s19
      %p25 = scmp.ge.s32.totalorder %s24, 1
      %s26 = scalar_select %p25, 0, %s24
      %s27 = sadd.s32 1, %s18
      %s28 = scalar_select %p25, %s27, %s18
      %p29 = scmp.ge.s32.totalorder %s28, 2
      %s30 = scalar_select %p29, 0, %s28
      %s31 = sadd.s32 %s18, %s19
      %s32 = sadd.s32 %s30, %s26
      %s33 = ssub.s32 %s31, %s32
      %p34 = scmp.eq.s32.totalorder %s33, 0
      %s36 = sadd.s32 %s35, 1
      %s37 = scalar_select %p34, %s35, %s36
      %p40 = pneg %p34
      %p41 = scmp.eq.s32.totalorder %s11, 1
      %p42 = por %p40, %p41
      %p43 = scmp.ne.s32.totalorder %s35, %s38
      %p44 = scmp.eq.s32.totalorder %s11, 0
      %p45 = por %p43, %p44
      %p46 = scmp.ne.s32.totalorder %s35, %s38
      %p47 = scmp.eq.s32.totalorder %s16, 1
      %p48 = por %p46, %p47
      %p49 = scmp.ne.s32.totalorder %s38, %s39
      %p50 = scmp.eq.s32.totalorder %s16, 0
      %p51 = por %p49, %p50
      %p52 = scmp.ne.s32.totalorder %s38, %s39
      %p53 = scmp.eq.s32.totalorder %s17, 1
      %p54 = por %p52, %p53
      %p56 = scmp.ne.s32.totalorder %s39, %s55
      %p57 = scmp.eq.s32.totalorder %s17, 0
      %p58 = por %p56, %p57
      %s59 = sadd.s32 %s18, %s19
      %s60 = sadd.s32 %s30, %s26
      %s61 = ssub.s32 %s59, %s60
      %p62 = scmp.eq.s32.totalorder %s61, 0
      %s64 = sadd.s32 %s63, 1
      %s65 = scalar_select %p62, %s63, %s64
      %p68 = pneg %p62
      %p69 = scmp.eq.s32.totalorder %s11, 1
      %p70 = por %p68, %p69
      %p71 = scmp.ne.s32.totalorder %s63, %s66
      %p72 = scmp.eq.s32.totalorder %s11, 0
      %p73 = por %p71, %p72
      %p74 = scmp.ne.s32.totalorder %s63, %s66
      %p75 = scmp.eq.s32.totalorder %s16, 1
      %p76 = por %p74, %p75
      %p77 = scmp.ne.s32.totalorder %s66, %s67
      %p78 = scmp.eq.s32.totalorder %s16, 0
      %p79 = por %p77, %p78
      %p80 = scmp.ne.s32.totalorder %s66, %s67
      %p81 = scmp.eq.s32.totalorder %s17, 1
      %p82 = por %p80, %p81
      %p84 = scmp.ne.s32.totalorder %s67, %s83
      %p85 = scmp.eq.s32.totalorder %s17, 0
      %p86 = por %p84, %p85
      %s87 = ssub.s32 %s18, %s30
      %p88 = scmp.eq.s32.totalorder %s87, 0
      %s90 = sadd.s32 %s89, 1
      %s91 = scalar_select %p88, %s89, %s90
      %p94 = pneg %p88
      %p95 = scmp.eq.s32.totalorder %s11, 1
      %p96 = por %p94, %p95
      %p97 = scmp.ne.s32.totalorder %s89, %s92
      %p98 = scmp.eq.s32.totalorder %s11, 0
      %p99 = por %p97, %p98
      %p100 = scmp.ne.s32.totalorder %s89, %s92
      %p101 = scmp.eq.s32.totalorder %s16, 1
      %p102 = por %p100, %p101
      %p103 = scmp.ne.s32.totalorder %s92, %s93
      %p104 = scmp.eq.s32.totalorder %s16, 0
      %p105 = por %p103, %p104
      %p106 = scmp.ne.s32.totalorder %s92, %s93
      %p107 = scmp.eq.s32.totalorder %s17, 1
      %p108 = por %p106, %p107
      %p110 = scmp.ne.s32.totalorder %s93, %s109
      %p111 = scmp.eq.s32.totalorder %s17, 0
      %p112 = por %p110, %p111
      %p113 = scmp.le.s32.totalorder 1, %s11
      %p114 = scmp.lt.s32.totalorder %s11, 3
      %p115 = pnand %p113, %p114
      %p116 = pneg %p115
      // Predicated region
      $region9: #{tpu_custom_call.1} parent=5 // pred_check
        _
      $region10: #{tpu_custom_call.1} parent=5 // pred_check_branch
        %118 = sbr.rel (%p115) target = $region12
      $region11: #{tpu_custom_call.1} parent=5 // pred_region
        %s119 = ssub.s32 %s11, 1
      $region12: #{tpu_custom_call.1} parent=5 // pred_fallthru
        _
      %p120 = scmp.lt.s32.totalorder %s11, 2
      // Predicated region
      $region13: #{tpu_custom_call.1} parent=5 // pred_check
        %p121 = pneg %p120
      $region14: #{tpu_custom_call.1} parent=5 // pred_check_branch
        %123 = sbr.rel (%p121) target = $region16
      $region15: #{tpu_custom_call.1} parent=5 // pred_region
        // Predicated region
        $region17: #{tpu_custom_call.1} parent=15 // pred_check
          %p124 = pneg %p45
        $region18: #{tpu_custom_call.1} parent=15 // pred_check_branch
          %126 = sbr.rel (%p124) target = $region20
        $region19: #{tpu_custom_call.1} parent=15 // pred_region
          %s127 = sadd.s32 %s18, %s19
          %p128 = scmp.lt.s32.totalorder %s127, 1
          %s129 = scalar_select %p128, %s127, 1
          %s130 = smul.addr %s129, 8
          %s131 = scalar_lea.vmem %s0, %s130
          %s132 = sadd.s32 %s18, %s19
        $region20: #{tpu_custom_call.1} parent=15 // pred_fallthru
          _
        // Predicated region
        $region21: #{tpu_custom_call.1} parent=15 // pred_check
          %p133 = pneg %p73
        $region22: #{tpu_custom_call.1} parent=15 // pred_check_branch
          %135 = sbr.rel (%p133) target = $region24
        $region23: #{tpu_custom_call.1} parent=15 // pred_region
          %s136 = sadd.s32 %s18, %s19
          %p137 = scmp.lt.s32.totalorder %s136, 1
          %s138 = scalar_select %p137, %s136, 1
          %s139 = smul.addr %s138, 8
          %s140 = scalar_lea.vmem %s1, %s139
          %s141 = sadd.s32 %s18, %s19
        $region24: #{tpu_custom_call.1} parent=15 // pred_fallthru
          _
      $region16: #{tpu_custom_call.1} parent=5 // pred_fallthru
        _
      %p142 = scmp.le.s32.totalorder 1, %s11
      %p143 = scmp.lt.s32.totalorder %s11, 3
      %p144 = pnand %p142, %p143
      %p145 = pneg %p144
      // Predicated region
      $region25: #{tpu_custom_call.1} parent=5 // pred_check
        _
      $region26: #{tpu_custom_call.1} parent=5 // pred_check_branch
        %147 = sbr.rel (%p144) target = $region28
      $region27: #{tpu_custom_call.1} parent=5 // pred_region
        %s148 = ssub.s32 %s11, 1
        %s149 = sadd.s32 %s20, %s21
        %p150 = scmp.lt.s32.totalorder %s149, 1
        %s151 = scalar_select %p150, %s149, 1
        %s152 = smul.addr %s151, 8
        %s153 = scalar_lea.vmem %s0, %s152
        %p154 = pneg %p51
        %p155 = pneg %p48
        %s156 = sadd.s32 %s20, %s21
        %p157 = scmp.lt.s32.totalorder %s156, 1
        %s158 = scalar_select %p157, %s156, 1
        %s159 = smul.addr %s158, 8
        %s160 = scalar_lea.vmem %s1, %s159
        %p161 = pneg %p79
        %p162 = pneg %p76
        %p163 = pneg %p105
        %p164 = pneg %p102
        %s165 = sand.u32 %s92, 1
        %s166 = scalar_lea.sflag [#allocation4], %s165
        %s167 = sand.u32 %s92, 1
        %s168 = smul.addr %s167, 8
        %s169 = scalar_lea.vmem [#allocation3], %s168
        %s170 = sadd.s32 %s20, %s21
        %p171 = scmp.lt.s32.totalorder %s170, 1
        %s172 = scalar_select %p171, %s170, 1
        %s173 = smul.addr %s172, 8
        %s174 = scalar_lea.vmem %s0, %s173
        %s175 = sadd.s32 %s20, %s21
        %s176 = sadd.s32 %s20, %s21
        %p177 = scmp.lt.s32.totalorder %s176, 1
        %s178 = scalar_select %p177, %s176, 1
        %s179 = smul.addr %s178, 8
        %s180 = scalar_lea.vmem %s1, %s179
        %s181 = sadd.s32 %s20, %s21
        %p182 = scmp.eq.s32.totalorder %s21, 0
        // Predicated region
        $region29: #{tpu_custom_call.1} parent=27 // pred_check
          %p183 = pneg %p182
        $region30: #{tpu_custom_call.1} parent=27 // pred_check_branch
          %185 = sbr.rel (%p183) target = $region32
        $region31: #{tpu_custom_call.1} parent=27 // pred_region
          %vm186 = vcmask 0
          %187 = vst.msk [vmem:[#allocation2] sm:$0x1] %vm186, 0.0
        $region32: #{tpu_custom_call.1} parent=27 // pred_fallthru
          _
        %v188 = vld [vmem:[%s174] sm:$0xff]
        %v189 = vld [vmem:[%s180] sm:$0xff]
        %vm190 = vcmask 261120
        %v191 = vsel %vm190, %v188, -inf
        %192 = vmax.xlane.f32.xlu0 %v191
        %v193 = vpop.xlane.xlu0 %192
        %v194 = vsub.f32 %v188, %v193
        %v195 = vmul.f32 %v194, 1.442695
        %v196 = vpow.pop %v195
        %v197 = vsel %vm190, %v196, 0.0
        %198 = vadd.xlane.f32.xlu0 %v197
        %v199 = vpop.xlane.xlu0 %198
        %v200 = vlog2.pop %v199
        %v201 = vmul.f32 %v200, 0.6931472
        %v202 = vadd.f32 %v193, %v201
        %v203 = vlaneseq
        %v204 = vand.u32 %v203, 127
        %205 = vset.pattern.permute.xlu0 0
        %206 = vperm.xlu0 %205, %v189
        %v207 = vpop.permute.xlu0 %206
        %vm208 = vcmp.eq.s32.totalorder %v204, %v207
        %v209 = vsel %vm208, %v188, 0.0
        %v210 = vsel %vm190, %v209, 0.0
        %211 = vadd.xlane.f32.xlu0 %v210
        %v212 = vpop.xlane.xlu0 %211
        %v213 = vsub.f32 %v202, %v212
        %s214 = sadd.s32 %s20, %s21
        %s215 = sadd.s32 %s214, 1
        %s216 = smul.u32 %s215, 8
        %p217 = scmp.gt.s32.totalorder %s216, 8
        // Predicated region
        $region33: #{tpu_custom_call.1} parent=27 // pred_check
          %p218 = pneg %p217
        $region34: #{tpu_custom_call.1} parent=27 // pred_check_branch
          %220 = sbr.rel (%p218) target = $region36
        $region35: #{tpu_custom_call.1} parent=27 // pred_region
          %v221 = vlaneseq
          %v222 = vshrl.u32 %v221, 7
          %s223 = smul.u32 %s214, 8
          %v224 = vstv %s223
          %v225 = vadd.s32 %v222, %v224
          %vm226 = vcmp.lt.s32.totalorder %v225, 8
          %v227 = vsel %vm226, %v213, 0.0
          %v228 = vld [vmem:[#allocation2] sm:$0x1]
          %v229 = vrot.slane %v227, 4
          %v230 = vadd.f32 %v227, %v229
          %v231 = vrot.slane %v230, 2
          %v232 = vadd.f32 %v230, %v231
          %v233 = vrot.slane %v232, 1
          %v234 = vadd.f32 %v232, %v233
          %v235 = vadd.f32 %v228, %v234
          %vm236 = vcmask 0
          %237 = vst.msk [vmem:[#allocation2] sm:$0x1] %vm236, %v235
        $region36: #{tpu_custom_call.1} parent=27 // pred_fallthru
          _
        %p238 = scmp.le.s32.totalorder %s216, 8
        // Predicated region
        $region37: #{tpu_custom_call.1} parent=27 // pred_check
          %p239 = pneg %p238
        $region38: #{tpu_custom_call.1} parent=27 // pred_check_branch
          %241 = sbr.rel (%p239) target = $region40
        $region39: #{tpu_custom_call.1} parent=27 // pred_region
          %v242 = vld [vmem:[#allocation2] sm:$0x1]
          %v243 = vrot.slane %v213, 4
          %v244 = vadd.f32 %v213, %v243
          %v245 = vrot.slane %v244, 2
          %v246 = vadd.f32 %v244, %v245
          %v247 = vrot.slane %v246, 1
          %v248 = vadd.f32 %v246, %v247
          %v249 = vadd.f32 %v242, %v248
          %vm250 = vcmask 0
          %251 = vst.msk [vmem:[#allocation2] sm:$0x1] %vm250, %v249
        $region40: #{tpu_custom_call.1} parent=27 // pred_fallthru
          _
        // Predicated region
        $region41: #{tpu_custom_call.1} parent=27 // pred_check
          %p252 = pneg %p182
        $region42: #{tpu_custom_call.1} parent=27 // pred_check_branch
          %254 = sbr.rel (%p252) target = $region44
        $region43: #{tpu_custom_call.1} parent=27 // pred_region
          %v255 = vld [vmem:[#allocation2] sm:$0x1]
          %v257 = vperm.slane %v255, 0
          %258 = vset.pattern.permute.xlu0 0
          %259 = vperm.xlu0 %258, %v257
          %v260 = vpop.permute.xlu0 %259
          %262 = vst [vmem:[%s169] sm:$0xff] %v260
        $region44: #{tpu_custom_call.1} parent=27 // pred_fallthru
          _
        %s263 = sand.u32 %s92, 1
        %s264 = scalar_lea.sflag [#allocation4], %s263
        %s265 = sand.u32 %s92, 1
        %s266 = smul.addr %s265, 8
        %s267 = scalar_lea.vmem [#allocation3], %s266
        // Predicated region
        $region45: #{tpu_custom_call.1} parent=27 // pred_check
          %p268 = pneg %p102
        $region46: #{tpu_custom_call.1} parent=27 // pred_check_branch
          %270 = sbr.rel (%p268) target = $region48
        $region47: #{tpu_custom_call.1} parent=27 // pred_region
          %272 = vsyncadd %s264, 0
          %s273 = smul.addr %s20, 8
          %s274 = scalar_lea.hbm %s2, %s273
          %s276 = sshll.u32 %s267, 4
          %s277 = int_to_ptr.vmem [resolvable:$true] %s276
          %s278 = sshll.u32 %s274, 4
          %s279 = int_to_ptr.hbm [resolvable:$true] %s278
          %281 = dma.vmem_to_hbm [thread:$0]  %s277, 128, %s279, %s264
        $region48: #{tpu_custom_call.1} parent=27 // pred_fallthru
          _
      $region28: #{tpu_custom_call.1} parent=5 // pred_fallthru
        _
      %p282 = scmp.le.s32.totalorder 2, %s11
      // Predicated region
      $region49: #{tpu_custom_call.1} parent=5 // pred_check
        %p283 = pneg %p282
      $region50: #{tpu_custom_call.1} parent=5 // pred_check_branch
        %285 = sbr.rel (%p283) target = $region52
      $region51: #{tpu_custom_call.1} parent=5 // pred_region
        %s286 = ssub.s32 %s11, 2
        // Predicated region
        $region53: #{tpu_custom_call.1} parent=51 // pred_check
          %p287 = pneg %p108
        $region54: #{tpu_custom_call.1} parent=51 // pred_check_branch
          %289 = sbr.rel (%p287) target = $region56
        $region55: #{tpu_custom_call.1} parent=51 // pred_region
          %s290 = sand.u32 %s93, 1
          %s291 = scalar_lea.sflag [#allocation4], %s290
          %s292 = sand.u32 %s93, 1
          %s293 = smul.addr %s292, 8
          %s294 = scalar_lea.vmem [#allocation3], %s293
          %296 = dma.done %s291, 128
        $region56: #{tpu_custom_call.1} parent=51 // pred_fallthru
          _
      $region52: #{tpu_custom_call.1} parent=5 // pred_fallthru
        _
    $region6: #{tpu_custom_call.1} parent=1 // loop_footer
      %s15 = sadd.s32 1, %s11
    $region7: #{tpu_custom_call.1} parent=1 // loop_footer_branch
      %10 = sbr.rel target = $region3
    $region8: #{tpu_custom_call.1} parent=1 // loop_exit
      _
    %297 = vsyncpa [#allocation4], 1
    %s298 = scalar_lea.sflag [#allocation4], 1
    %299 = vsyncpa %s298, 1

</llo_original>
